<compile_context>
chip_gen: v6e
topology: v6e:2x2x1
jax: 0.10.0
libtpu: 0.0.40
codegen_flags: <defaults>
</compile_context>

<pallas_src>
import functools
import math

import jax
import jax.numpy as jnp
from jax.experimental import pallas as pl
from jax.experimental.pallas import tpu as pltpu

MXU_DTYPE = jnp.bfloat16   # MXU operand dtype; accumulation and elementwise math stay f32
LN_EPS = 1e-12


# ------------------------------ helpers (traced inline in kernels) ------------------------------

def _gelu_tanh(x):
    # TODO(synk): HF BERT uses exact erf-GELU; tanh approximation used for portable lowering.
    return 0.5 * x * (1.0 + jnp.tanh(0.7978845608028654 * (x + 0.044715 * x * x * x)))


def _layernorm(y, g, b):
    mean = jnp.mean(y, axis=-1, keepdims=True)
    yc = y - mean
    var = jnp.mean(yc * yc, axis=-1, keepdims=True)
    return (yc * jax.lax.rsqrt(var + LN_EPS)) * g + b


def _choose_tm(M):
    """Largest row-tile <= 512 that divides M (multiple of 8 preferred)."""
    for cand in (512, 256, 128, 64, 32, 16, 8):
        if M % cand == 0:
            return cand
    return M


# ----------------------------------- Pallas kernels -----------------------------------

def _dense_kernel(x_ref, w_ref, b_ref, o_ref, *, activation):
    y = jnp.dot(x_ref[...].astype(MXU_DTYPE), w_ref[...].astype(MXU_DTYPE),
                preferred_element_type=jnp.float32)
    y = y + b_ref[...]                      # (1, N) broadcasts over rows
    if activation == "gelu":
        y = _gelu_tanh(y)
    o_ref[...] = y.astype(o_ref.dtype)


def dense(x, w, b, activation=None):
    """y = act(x @ w + b);  x:[M,K], w:[K,N], b:[N] -> [M,N]; M-tiled parallel grid."""
    M, K = x.shape
    N = w.shape[1]
    tm = _choose_tm(M)
    kernel = functools.partial(_dense_kernel, activation=activation)
    return pl.pallas_call(
        kernel,
        grid=(M // tm,),
        in_specs=[pl.BlockSpec((tm, K), lambda i: (i, 0)),
                  pl.BlockSpec((K, N), lambda i: (0, 0)),
                  pl.BlockSpec((1, N), lambda i: (0, 0))],
        out_specs=pl.BlockSpec((tm, N), lambda i: (i, 0)),
        out_shape=jax.ShapeDtypeStruct((M, N), jnp.float32),
        compiler_params=pltpu.CompilerParams(dimension_semantics=("parallel",)),
    )(x, w, b.reshape(1, N))


def _ln_kernel(x_ref, g_ref, b_ref, o_ref):
    o_ref[...] = _layernorm(x_ref[...], g_ref[...], b_ref[...]).astype(o_ref.dtype)


def layernorm(x, gamma, beta):
    """Residual-free LayerNorm over the last axis; x:[M,H]."""
    M, H = x.shape
    tm = _choose_tm(M)
    return pl.pallas_call(
        _ln_kernel,
        grid=(M // tm,),
        in_specs=[pl.BlockSpec((tm, H), lambda i: (i, 0)),
                  pl.BlockSpec((1, H), lambda i: (0, 0)),
                  pl.BlockSpec((1, H), lambda i: (0, 0))],
        out_specs=pl.BlockSpec((tm, H), lambda i: (i, 0)),
        out_shape=jax.ShapeDtypeStruct((M, H), jnp.float32),
        compiler_params=pltpu.CompilerParams(dimension_semantics=("parallel",)),
    )(x, gamma.reshape(1, H), beta.reshape(1, H))


def _attn_block_kernel(qkv_ref, res_ref, bias_ref, wo_ref, bo_ref, g_ref, b_ref,
                       o_ref, *, nH, scale):
    # One batch element per grid step: all heads + output projection + residual + LN1.
    _, S, H3 = qkv_ref.shape
    H = H3 // 3
    Dh = H // nH

    qkv = qkv_ref[0]                        # (S, 3H): [q | k | v]
    res = res_ref[0]                        # (S, H) residual (attention input)
    bias = bias_ref[0]                      # (1, S) additive mask
    wo = wo_ref[...]                        # (H, H)

    acc = jnp.zeros((S, H), jnp.float32)
    # TODO(synk): for large S switch to flash-style KV tiling (online softmax) and
    # batched-head einsum to fill lanes; full (S,S) scores per head are fine at this scale.
    for h in range(nH):
        q = qkv[:, h * Dh:(h + 1) * Dh].astype(MXU_DTYPE)
        k = qkv[:, H + h * Dh:H + (h + 1) * Dh].astype(MXU_DTYPE)
        v = qkv[:, 2 * H + h * Dh:2 * H + (h + 1) * Dh].astype(MXU_DTYPE)

        s = jnp.dot(q, k.T, preferred_element_type=jnp.float32) * scale + bias  # (S, S)
        s = s - jnp.max(s, axis=-1, keepdims=True)
        p = jnp.exp(s)
        p = p * pl.reciprocal(jnp.sum(p, axis=-1, keepdims=True), approx=True)

        ctx = jnp.dot(p.astype(MXU_DTYPE), v, preferred_element_type=jnp.float32)  # (S, Dh)
        # Output projection distributes over heads: accumulate ctx_h @ wo[h-slice, :].
        w_h = wo[h * Dh:(h + 1) * Dh, :].astype(MXU_DTYPE)
        acc = acc + jnp.dot(ctx.astype(MXU_DTYPE), w_h, preferred_element_type=jnp.float32)

    y = acc + bo_ref[...] + res
    o_ref[0] = _layernorm(y, g_ref[...], b_ref[...]).astype(o_ref.dtype)


def attention_block(qkv, x_res, mask_bias, wo, bo, gamma, beta, *, nH):
    """Fused multi-head attention + output projection + residual + LayerNorm.

    qkv:[B,S,3H] (fused projection output), x_res:[B,S,H], mask_bias:[B,1,S] additive.
    """
    B, S, H3 = qkv.shape
    H = H3 // 3
    Dh = H // nH
    kernel = functools.partial(_attn_block_kernel, nH=nH, scale=1.0 / math.sqrt(Dh))
    return pl.pallas_call(
        kernel,
        grid=(B,),
        in_specs=[pl.BlockSpec((1, S, H3), lambda i: (i, 0, 0)),
                  pl.BlockSpec((1, S, H), lambda i: (i, 0, 0)),
                  pl.BlockSpec((1, 1, S), lambda i: (i, 0, 0)),
                  pl.BlockSpec((H, H), lambda i: (0, 0)),
                  pl.BlockSpec((1, H), lambda i: (0, 0)),
                  pl.BlockSpec((1, H), lambda i: (0, 0)),
                  pl.BlockSpec((1, H), lambda i: (0, 0))],
        out_specs=pl.BlockSpec((1, S, H), lambda i: (i, 0, 0)),
        out_shape=jax.ShapeDtypeStruct((B, S, H), jnp.float32),
        compiler_params=pltpu.CompilerParams(dimension_semantics=("parallel",)),
    )(qkv, x_res, mask_bias, wo, bo.reshape(1, H), gamma.reshape(1, H), beta.reshape(1, H))


def _ffn_kernel(x_ref, wi_ref, bi_ref, wo2_ref, bo2_ref, g_ref, b_ref, o_ref):
    x = x_ref[...]
    h = jnp.dot(x.astype(MXU_DTYPE), wi_ref[...].astype(MXU_DTYPE),
                preferred_element_type=jnp.float32) + bi_ref[...]
    h = _gelu_tanh(h)
    y = jnp.dot(h.astype(MXU_DTYPE), wo2_ref[...].astype(MXU_DTYPE),
                preferred_element_type=jnp.float32) + bo2_ref[...]
    o_ref[...] = _layernorm(y + x, g_ref[...], b_ref[...]).astype(o_ref.dtype)


def ffn_block(x, wi, bi, wo2, bo2, gamma, beta):
    """Fused FFN: LN2(gelu(x@wi+bi)@wo2 + bo2 + x);  x:[M,H]."""
    M, H = x.shape
    I = wi.shape[1]
    tm = _choose_tm(M)
    return pl.pallas_call(
        _ffn_kernel,
        grid=(M // tm,),
        in_specs=[pl.BlockSpec((tm, H), lambda i: (i, 0)),
                  pl.BlockSpec((H, I), lambda i: (0, 0)),
                  pl.BlockSpec((1, I), lambda i: (0, 0)),
                  pl.BlockSpec((I, H), lambda i: (0, 0)),
                  pl.BlockSpec((1, H), lambda i: (0, 0)),
                  pl.BlockSpec((1, H), lambda i: (0, 0)),
                  pl.BlockSpec((1, H), lambda i: (0, 0))],
        out_specs=pl.BlockSpec((tm, H), lambda i: (i, 0)),
        out_shape=jax.ShapeDtypeStruct((M, H), jnp.float32),
        compiler_params=pltpu.CompilerParams(dimension_semantics=("parallel",)),
    )(x, wi, bi.reshape(1, I), wo2, bo2.reshape(1, H),
      gamma.reshape(1, H), beta.reshape(1, H))


# ------------------------------------- model (glue) -------------------------------------

def init_params(key, *, vocab=64, type_vocab=2, max_pos=16, H=32, nH=4,
                inter=128, num_layers=2):
    def nrm(k, shape):
        return (0.02 * jax.random.normal(k, shape)).astype(jnp.float32)

    keys = jax.random.split(key, 4 + num_layers)
    params = {
        "word_emb": nrm(keys[0], (vocab, H)),
        "pos_emb": nrm(keys[1], (max_pos, H)),
        "type_emb": nrm(keys[2], (type_vocab, H)),
        "emb_ln_g": jnp.ones((H,), jnp.float32),
        "emb_ln_b": jnp.zeros((H,), jnp.float32),
        "qa_w": nrm(keys[3], (H, 2)),
        "qa_b": jnp.zeros((2,), jnp.float32),
        "nH": nH,
        "layers": [],
    }
    for li in range(num_layers):
        lk = jax.random.split(keys[4 + li], 4)
        params["layers"].append({
            # fused QKV projection weight [H, 3H] = [wq | wk | wv]
            "w_qkv": nrm(lk[0], (H, 3 * H)),
            "b_qkv": jnp.zeros((3 * H,), jnp.float32),
            "wo": nrm(lk[1], (H, H)), "bo": jnp.zeros((H,), jnp.float32),
            "ln1_g": jnp.ones((H,), jnp.float32), "ln1_b": jnp.zeros((H,), jnp.float32),
            "wi": nrm(lk[2], (H, inter)), "bi": jnp.zeros((inter,), jnp.float32),
            "wo2": nrm(lk[3], (inter, H)), "bo2": jnp.zeros((H,), jnp.float32),
            "ln2_g": jnp.ones((H,), jnp.float32), "ln2_b": jnp.zeros((H,), jnp.float32),
        })
    return params


def encoder_layer(p, x, mask_bias, B, S, nH):
    M, H = x.shape
    # 1) fused QKV projection (single matmul, x read once).
    qkv = dense(x, p["w_qkv"], p["b_qkv"])                                 # [M, 3H]
    # 2) attention + output projection + residual + LN1 (one kernel per batch element).
    x = attention_block(qkv.reshape(B, S, 3 * H), x.reshape(B, S, H), mask_bias,
                        p["wo"], p["bo"], p["ln1_g"], p["ln1_b"], nH=nH).reshape(M, H)
    # 3) fused FFN + residual + LN2.
    x = ffn_block(x, p["wi"], p["bi"], p["wo2"], p["bo2"], p["ln2_g"], p["ln2_b"])
    return x


def cross_entropy_ignore(logits, targets, ignore_index):
    # logits: [B, C]; targets: [B] ints in [0, ignore_index]; ignore where == ignore_index
    lse = jax.scipy.special.logsumexp(logits, axis=-1)
    safe_t = jnp.where(targets == ignore_index, 0, targets)
    picked = jnp.take_along_axis(logits, safe_t[:, None], axis=-1)[:, 0]
    per_ex = lse - picked
    valid = (targets != ignore_index).astype(jnp.float32)
    return jnp.sum(per_ex * valid) / jnp.maximum(jnp.sum(valid), 1.0)


def malay_qa_forward(params, input_ids, attention_mask, token_type_ids,
                     start_positions=None, end_positions=None):
    B, S = input_ids.shape
    H = params["word_emb"].shape[1]
    nH = params["nH"]

    pos_ids = jnp.arange(S)[None, :]
    emb = (params["word_emb"][input_ids]
           + params["pos_emb"][pos_ids]
           + params["type_emb"][token_type_ids])
    x = emb.reshape(B * S, H).astype(jnp.float32)
    x = layernorm(x, params["emb_ln_g"], params["emb_ln_b"])   # residual-free LN

    mask_bias = ((1.0 - attention_mask.astype(jnp.float32)) * -1e9).reshape(B, 1, S)

    for layer in params["layers"]:
        x = encoder_layer(layer, x, mask_bias, B, S, nH)

    # qa_outputs: pad N=2 -> 128 so the matmul output is lane-dense; slice in JAX.
    qa_w = params["qa_w"]
    qa_b = params["qa_b"]
    qa_w_pad = jnp.pad(qa_w, ((0, 0), (0, 128 - qa_w.shape[1])))
    qa_b_pad = jnp.pad(qa_b, (0, 128 - qa_b.shape[0]))
    logits = dense(x, qa_w_pad, qa_b_pad)[:, :2].reshape(B, S, 2)
    start_logits = logits[..., 0]   # squeeze(-1) of split(1, dim=-1)
    end_logits = logits[..., 1]

    total_loss = None
    if start_positions is not None and end_positions is not None:
        ignored_index = S
        sp = jnp.clip(start_positions, 0, ignored_index)
        ep = jnp.clip(end_positions, 0, ignored_index)
        start_loss = cross_entropy_ignore(start_logits, sp, ignored_index)
        end_loss = cross_entropy_ignore(end_logits, ep, ignored_index)
        total_loss = (start_loss + end_loss) / 2.0

    return total_loss, start_logits, end_logits


# ----------------------------------------- main -----------------------------------------

if __name__ == "__main__":
    key = jax.random.PRNGKey(0)
    kp, ki, km, ks, ke = jax.random.split(key, 5)

    B, S = 2, 8
    VOCAB = 64
    params = init_params(kp, vocab=VOCAB, type_vocab=2, max_pos=16,
                         H=32, nH=4, inter=128, num_layers=2)

    input_ids = jax.random.randint(ki, (B, S), 0, VOCAB, dtype=jnp.int32)
    attention_mask = jnp.concatenate(
        [jnp.ones((B, S - 2), jnp.int32), jnp.zeros((B, 2), jnp.int32)], axis=1)
    token_type_ids = jnp.zeros((B, S), jnp.int32)
    start_positions = jax.random.randint(ks, (B,), 0, S, dtype=jnp.int32)
    end_positions = jax.random.randint(ke, (B,), 0, S, dtype=jnp.int32)

    loss, start_logits, end_logits = malay_qa_forward(
        params, input_ids, attention_mask, token_type_ids,
        start_positions, end_positions)

    jax.block_until_ready((loss, start_logits, end_logits))
    assert start_logits.shape == (B, S) and end_logits.shape == (B, S)
    assert loss.shape == ()
    print("KERNEL_OK")
</pallas_src>

<mosaic_0001>
module attributes {stable_mosaic.version = 11 : i64} {
  func.func @_ln_kernel(%arg0: i32, %arg1: memref<16x32xf32, #tpu.memory_space<vmem>>, %arg2: memref<1x32xf32, #tpu.memory_space<vmem>>, %arg3: memref<1x32xf32, #tpu.memory_space<vmem>>, %arg4: memref<16x32xf32, #tpu.memory_space<vmem>>) attributes {dimension_semantics = [#tpu.dimension_semantics<parallel>], iteration_bounds = array<i64: 1>, scalar_prefetch = 0 : i64, scratch_operands = 0 : i64, tpu.core_type = #tpu.core_type<tc>, window_params = [{transform_indices = @transform_0, window_bounds = array<i64: 16, 32>}, {pipeline_mode = #tpu.pipeline_mode<synchronous>, transform_indices = @transform_1, window_bounds = array<i64: 1, 32>}, {pipeline_mode = #tpu.pipeline_mode<synchronous>, transform_indices = @transform_2, window_bounds = array<i64: 1, 32>}, {transform_indices = @transform_3, window_bounds = array<i64: 16, 32>}]} {
    %c0 = arith.constant 0 : index
    %c0_0 = arith.constant 0 : index
    %0 = vector.load %arg1[%c0, %c0_0] : memref<16x32xf32, #tpu.memory_space<vmem>>, vector<16x32xf32>
    %c0_1 = arith.constant 0 : index
    %c0_2 = arith.constant 0 : index
    %1 = vector.load %arg2[%c0_1, %c0_2] : memref<1x32xf32, #tpu.memory_space<vmem>>, vector<1x32xf32>
    %c0_3 = arith.constant 0 : index
    %c0_4 = arith.constant 0 : index
    %2 = vector.load %arg3[%c0_3, %c0_4] : memref<1x32xf32, #tpu.memory_space<vmem>>, vector<1x32xf32>
    %cst = arith.constant dense<0.000000e+00> : vector<16xf32>
    %3 = vector.multi_reduction <add>, %0, %cst [1] : vector<16x32xf32> to vector<16xf32>
    %4 = vector.shape_cast %3 : vector<16xf32> to vector<16x1xf32>
    %cst_5 = arith.constant 3.200000e+01 : f32
    %5 = vector.broadcast %cst_5 : f32 to vector<16x1xf32>
    %6 = arith.divf %4, %5 : vector<16x1xf32>
    %7 = vector.broadcast %6 : vector<16x1xf32> to vector<16x32xf32>
    %8 = arith.subf %0, %7 : vector<16x32xf32>
    %9 = arith.mulf %8, %8 : vector<16x32xf32>
    %cst_6 = arith.constant dense<0.000000e+00> : vector<16xf32>
    %10 = vector.multi_reduction <add>, %9, %cst_6 [1] : vector<16x32xf32> to vector<16xf32>
    %11 = vector.shape_cast %10 : vector<16xf32> to vector<16x1xf32>
    %cst_7 = arith.constant 3.200000e+01 : f32
    %12 = vector.broadcast %cst_7 : f32 to vector<16x1xf32>
    %13 = arith.divf %11, %12 : vector<16x1xf32>
    %cst_8 = arith.constant 9.99999996E-13 : f32
    %14 = vector.broadcast %cst_8 : f32 to vector<16x1xf32>
    %15 = arith.addf %13, %14 : vector<16x1xf32>
    %16 = math.rsqrt %15 : vector<16x1xf32>
    %17 = vector.broadcast %16 : vector<16x1xf32> to vector<16x32xf32>
    %18 = arith.mulf %8, %17 : vector<16x32xf32>
    %19 = vector.broadcast %1 : vector<1x32xf32> to vector<16x32xf32>
    %20 = arith.mulf %18, %19 : vector<16x32xf32>
    %21 = vector.broadcast %2 : vector<1x32xf32> to vector<16x32xf32>
    %22 = arith.addf %20, %21 : vector<16x32xf32>
    %c0_9 = arith.constant 0 : index
    %c0_10 = arith.constant 0 : index
    %23 = vector.load %arg4[%c0_9, %c0_10] : memref<16x32xf32, #tpu.memory_space<vmem>>, vector<16x32xf32>
    tpu.vector_store %arg4[%c0_9, %c0_10], %22 {strides = array<i32>} : memref<16x32xf32, #tpu.memory_space<vmem>>, vector<16x32xf32>,
    return
  }
  func.func @transform_0(%arg0: i32) -> (i32, i32) {
    %c0_i32 = arith.constant 0 : i32
    %c0_i32_0 = arith.constant 0 : i32
    return %arg0, %c0_i32 : i32, i32
  }
  func.func @transform_1(%arg0: i32) -> (i32, i32) {
    %c0_i32 = arith.constant 0 : i32
    %c0_i32_0 = arith.constant 0 : i32
    %c0_i32_1 = arith.constant 0 : i32
    return %c0_i32, %c0_i32_0 : i32, i32
  }
  func.func @transform_2(%arg0: i32) -> (i32, i32) {
    %c0_i32 = arith.constant 0 : i32
    %c0_i32_0 = arith.constant 0 : i32
    %c0_i32_1 = arith.constant 0 : i32
    return %c0_i32, %c0_i32_0 : i32, i32
  }
  func.func @transform_3(%arg0: i32) -> (i32, i32) {
    %c0_i32 = arith.constant 0 : i32
    %c0_i32_0 = arith.constant 0 : i32
    return %arg0, %c0_i32 : i32, i32
  }
}

</mosaic_0001>

<llo_original>
// kernel: tpu_custom_call.1
$region0: #{tpu_custom_call.1}
  #allocation0 [shape = 'u32[]', space=smem, size = 0x4, offset = 0x4, fixed_abs, tag = 'smem constant byte address 0x4 - core index']
  #allocation1 [shape = 'u32[144,128]{1,0:T(1,128)}', space=vmem, size = 0x12000, scoped, tag = 'internal scratch']
  %s0 = inlined_call_operand.hbm [shape: f32[16,32], index: 0, kind: input, shape index: {}]
  %s1 = inlined_call_operand.vmem [shape: f32[1,32], index: 1, kind: input, shape index: {}]
  %s2 = inlined_call_operand.vmem [shape: f32[1,32], index: 2, kind: input, shape index: {}]
  %s3 = inlined_call_operand.hbm [shape: f32[16,32], index: 3, kind: output, shape index: {}]
  %s4 = sld [smem:[#allocation0]]
  $region26: #{tpu_custom_call.1} parent=0
    _
  %s6 = ssub.s32 1, %s4
  %s7 = scalar_select 0, %s6, %s4
  $region1: #{tpu_custom_call.1} parent=0
    #allocation2 [shape = 'u8[8192]{0}', space=vmem, size = 0x2000, scoped, tag = 'input window, operand 0, single buffered']
    #allocation3 [shape = 's32[1]{0}', space=sflag, size = 0x4, scoped, tag = 'scoped memory for tpu_custom_call.1']
    #allocation4 [shape = 's32[1]{0}', space=sflag, size = 0x4, scoped, tag = 'scoped memory for tpu_custom_call.1']
    #allocation5 [shape = 'u8[8192]{0}', space=vmem, size = 0x2000, scoped, tag = 'output window, operand 0, single buffered']
    %8 = vsyncpa [#allocation3], 0
    %9 = vsyncpa [#allocation4], 0
    // Predicated region
    $region2: #{tpu_custom_call.1} parent=1 // pred_check
      _
    $region3: #{tpu_custom_call.1} parent=1 // pred_check_branch
      %11 = sbr.rel (0) target = $region5
    $region4: #{tpu_custom_call.1} parent=1 // pred_region
      %s13 = ssub.s32 256, 256
      %14 = vsyncadd [#allocation3], %s13
      %s15 = sshll.u32 [#allocation2], 4
      %s16 = int_to_ptr.vmem [resolvable:$true] %s15
      %21 = dma.hbm_to_vmem [thread:$0]  %s0, 256, %s16, [#allocation3], 128, 128, 8
    $region5: #{tpu_custom_call.1} parent=1 // pred_fallthru
      _
    // Predicated region
    $region6: #{tpu_custom_call.1} parent=1 // pred_check
      _
    $region7: #{tpu_custom_call.1} parent=1 // pred_check_branch
      %23 = sbr.rel (0) target = $region9
    $region8: #{tpu_custom_call.1} parent=1 // pred_region
      _
    $region9: #{tpu_custom_call.1} parent=1 // pred_fallthru
      _
    // Predicated region
    $region10: #{tpu_custom_call.1} parent=1 // pred_check
      _
    $region11: #{tpu_custom_call.1} parent=1 // pred_check_branch
      %25 = sbr.rel (0) target = $region13
    $region12: #{tpu_custom_call.1} parent=1 // pred_region
      _
    $region13: #{tpu_custom_call.1} parent=1 // pred_fallthru
      _
    // Predicated region
    $region14: #{tpu_custom_call.1} parent=1 // pred_check
      _
    $region15: #{tpu_custom_call.1} parent=1 // pred_check_branch
      %27 = sbr.rel (0) target = $region17
    $region16: #{tpu_custom_call.1} parent=1 // pred_region
      %28 = dma.done [#allocation3], 256
    $region17: #{tpu_custom_call.1} parent=1 // pred_fallthru
      _
    %v29 = vld [vmem:[#allocation2] sm:$0xff]
    %v30 = vld [vmem:[#allocation2 + $0x8] sm:$0xff]
    %v31 = vld [vmem:[%s1] sm:$0x1]
    %v32 = vld [vmem:[%s2] sm:$0x1]
    %vm33 = vcmask 261120
    %v34 = vsel %vm33, %v29, 0.0
    %35 = vadd.xlane.f32.xlu0 %v34
    %v36 = vpop.xlane.xlu0 %35
    %v37 = vsel %vm33, %v30, 0.0
    %38 = vadd.xlane.f32.xlu0 %v37
    %v39 = vpop.xlane.xlu0 %38
    %v40 = vrcp.pop 32.0
    %v41 = vmul.f32 %v36, %v40
    %v42 = vmul.f32 %v39, %v40
    %v43 = vsub.f32 %v29, %v41
    %v44 = vsub.f32 %v30, %v42
    %v45 = vmul.f32 %v43, %v43
    %v46 = vmul.f32 %v44, %v44
    %v47 = vsel %vm33, %v45, 0.0
    %48 = vadd.xlane.f32.xlu0 %v47
    %v49 = vpop.xlane.xlu0 %48
    %v50 = vsel %vm33, %v46, 0.0
    %51 = vadd.xlane.f32.xlu0 %v50
    %v52 = vpop.xlane.xlu0 %51
    %v53 = vmul.f32 %v49, %v40
    %v54 = vmul.f32 %v52, %v40
    %v55 = vadd.f32 %v53, 1e-12
    %v56 = vadd.f32 %v54, 1e-12
    %v57 = vrsqrt.pop %v55
    %v58 = vrsqrt.pop %v56
    %v59 = vmul.f32 %v43, %v57
    %v60 = vmul.f32 %v44, %v58
    %v62 = vlaneseq
    %v63 = vshrl.u32 %v62, 7
    %v64 = vsub.s32 0, %v63
    %v65 = vrot.slane %v31, %v64
    %v67 = vmul.f32 %v59, %v65
    %v68 = vmul.f32 %v60, %v65
    %v70 = vlaneseq
    %v71 = vshrl.u32 %v70, 7
    %v72 = vsub.s32 0, %v71
    %v73 = vrot.slane %v32, %v72
    %v75 = vadd.f32 %v67, %v73
    %v76 = vadd.f32 %v68, %v73
    %77 = vst.msk [vmem:[#allocation5] sm:$0xff] %vm33, %v75
    %78 = vst.msk [vmem:[#allocation5 + $0x8] sm:$0xff] %vm33, %v76
    // Predicated region
    $region18: #{tpu_custom_call.1} parent=1 // pred_check
      _
    $region19: #{tpu_custom_call.1} parent=1 // pred_check_branch
      %80 = sbr.rel (0) target = $region21
    $region20: #{tpu_custom_call.1} parent=1 // pred_region
      %s82 = ssub.s32 256, 256
      %83 = vsyncadd [#allocation4], %s82
      %s84 = sshll.u32 [#allocation5], 4
      %s85 = int_to_ptr.vmem [resolvable:$true] %s84
      %90 = dma.vmem_to_hbm [thread:$0]  %s85, 256, %s3, [#allocation4], 128, 128, 8
    $region21: #{tpu_custom_call.1} parent=1 // pred_fallthru
      _
    // Predicated region
    $region22: #{tpu_custom_call.1} parent=1 // pred_check
      _
    $region23: #{tpu_custom_call.1} parent=1 // pred_check_branch
      %92 = sbr.rel (0) target = $region25
    $region24: #{tpu_custom_call.1} parent=1 // pred_region
      %93 = dma.done [#allocation4], 256
    $region25: #{tpu_custom_call.1} parent=1 // pred_fallthru
      _
    %94 = vsyncpa [#allocation3], 1
    %95 = vsyncpa [#allocation4], 1

</llo_original>
